<compile_context>
chip_gen: v5e
topology: v5e:2x2
jax: 0.10.0
libtpu: 0.0.40
codegen_flags: <defaults>
</compile_context>

<pallas_src>
import math
import numpy as np

import jax
import jax.numpy as jnp
from jax.experimental import pallas as pl
from jax.experimental.pallas import tpu as pltpu


_LOG_0_3 = math.log(0.3)


# ----------------------------------------------------------------------------
# Pallas kernel: elementwise [Gp, T] hot path
#   prior[g, p] = exp(-dx^2/(2*sx^2) - dy^2/(2*sy^2)) * inside_mask[g, p]
# with dx = (px[p] - cx[g]) / stride[p] - mean_x[label[g]]  (same for y).
# ----------------------------------------------------------------------------
def _make_center_prior_kernel(soft_prior: bool):
    def kernel(ppt_ref, gpar_ref, mask_ref, out_ref):
        # ppt_ref : [3, T]   rows = (px, py, 1/stride)                  per-point
        # gpar_ref: [Gp, 8]  cols = (cx, cy, mx, my, isx, isy, 0, 0)    per-gt
        # mask_ref: [Gp, T]  int8 inside-gt-bbox mask
        # out_ref : [Gp, T]  f32  center prior weights
        px = ppt_ref[0:1, :]            # [1, T]
        py = ppt_ref[1:2, :]
        inv_s = ppt_ref[2:3, :]
        cx = gpar_ref[:, 0:1]           # [Gp, 1]
        cy = gpar_ref[:, 1:2]
        mx = gpar_ref[:, 2:3]
        my = gpar_ref[:, 3:4]
        isx = gpar_ref[:, 4:5]
        isy = gpar_ref[:, 5:6]

        dx = (px - cx) * inv_s - mx     # [Gp, T]
        dy = (py - cy) * inv_s - my
        arg = -(dx * dx) * isx - (dy * dy) * isy   # = log(prior), always <= 0
        if soft_prior:
            prior = jnp.exp(arg)
        else:
            # exp(arg) > 0.3  <=>  arg > log(0.3); skips the transcendental.
            prior = jnp.where(arg > _LOG_0_3, 1.0, 0.0)
        out_ref[...] = jnp.where(mask_ref[...] != 0, prior, 0.0)
    return kernel


def _round_up(x, m):
    return ((x + m - 1) // m) * m


def _pick_point_tile(num_points, gp, vmem_budget_bytes=12 * 1024 * 1024):
    # Double-buffered per-lane streams: int8 mask (1B) + f32 out (4B) per gt row,
    # plus the packed per-point rows (3 x 4B).  Budget stays well under the
    # default scoped VMEM limits on v5e (16 MiB) and v7x (32 MiB of 64 MiB).
    bytes_per_lane = 2 * (gp * 5 + 3 * 4)
    t = vmem_budget_bytes // bytes_per_lane
    t = max(128, min(4096, (t // 128) * 128))
    return min(t, max(128, _round_up(num_points, 128)))


def center_prior_forward(anchor_points_list, gt_bboxes, labels,
                         inside_gt_bbox_mask, mean, sigma,
                         strides=(8, 16, 32, 64, 128), soft_prior=True,
                         point_tile=None):
    """JAX/Pallas equivalent of CenterPrior.forward.

    anchor_points_list : list of [N_lvl, 2] float32 arrays
    gt_bboxes          : [G, 5] float32 (cx, cy, w, h, angle) -- only cx, cy used
    labels             : [G] int32
    inside_gt_bbox_mask: [P_total, G] bool
    mean, sigma        : [num_classes, 2] float32 (frozen params)
    """
    num_gts = int(labels.shape[0])
    num_points = int(sum(p.shape[0] for p in anchor_points_list))
    if num_gts == 0:
        return (jnp.zeros((num_points, 0), jnp.float32), inside_gt_bbox_mask)

    # ---- glue: flatten levels, gather per-gt params (cheap, plain JAX) ----
    points = jnp.concatenate(anchor_points_list, axis=0).astype(jnp.float32)   # [P, 2]
    inv_stride = jnp.concatenate(
        [jnp.full((p.shape[0],), 1.0 / float(s), jnp.float32)
         for p, s in zip(anchor_points_list, strides)], axis=0)                # [P]

    gt_cx = gt_bboxes[:, 0].astype(jnp.float32)                                # [G]
    gt_cy = gt_bboxes[:, 1].astype(jnp.float32)
    inst_mean = mean[labels].astype(jnp.float32)                               # [G, 2]
    inst_sigma = sigma[labels].astype(jnp.float32)                             # [G, 2]
    inv_two_sigma_sq = 1.0 / (2.0 * inst_sigma * inst_sigma)                   # [G, 2]

    P, G = num_points, num_gts
    Gp = _round_up(G, 8)                       # gts on sublanes: pad to x8 only
    T = point_tile if point_tile is not None else _pick_point_tile(P, Gp)
    T = max(128, _round_up(T, 128))            # points on lanes: x128 tiles
    Pp = _round_up(P, T)

    # Packed per-point rows [3, Pp]: (px, py, 1/stride)
    ppt = jnp.stack([points[:, 0], points[:, 1], inv_stride], axis=0)
    ppt = jnp.pad(ppt, ((0, 0), (0, Pp - P)))

    # Packed per-gt columns [Gp, 8]: (cx, cy, mx, my, isx, isy, 0, 0)
    gpar = jnp.stack([gt_cx, gt_cy, inst_mean[:, 0], inst_mean[:, 1],
                      inv_two_sigma_sq[:, 0], inv_two_sigma_sq[:, 1]], axis=1)  # [G, 6]
    gpar = jnp.pad(gpar, ((0, Gp - G), (0, 2)))

    # Mask streamed as int8, already in the [Gp, Pp] kernel layout.
    mask_t = jnp.pad(inside_gt_bbox_mask.astype(jnp.int8).T,
                     ((0, Gp - G), (0, Pp - P)))                                # [Gp, Pp]

    # ---- pallas_call: grid over point tiles (lane axis); gts resident on sublanes
    out = pl.pallas_call(
        _make_center_prior_kernel(soft_prior),
        out_shape=jax.ShapeDtypeStruct((Gp, Pp), jnp.float32),
        grid_spec=pltpu.PrefetchScalarGridSpec(
            num_scalar_prefetch=0,
            grid=(Pp // T,),
            in_specs=[
                pl.BlockSpec((3, T), lambda i: (0, i)),    # packed per-point rows
                pl.BlockSpec((Gp, 8), lambda i: (0, 0)),   # packed per-gt params
                pl.BlockSpec((Gp, T), lambda i: (0, i)),   # int8 mask tile
            ],
            out_specs=pl.BlockSpec((Gp, T), lambda i: (0, i)),
        ),
        compiler_params=pltpu.CompilerParams(
            dimension_semantics=("parallel",),
            vmem_limit_bytes=32 * 1024 * 1024),
    )(ppt, gpar, mask_t)

    # Back to the module's [P, G] contract (small copy since G is small).
    center_prior_weights = out[:G, :P].T
    return center_prior_weights, inside_gt_bbox_mask


# ----------------------------------------------------------------------------
# Pure-JAX reference (mirrors the PyTorch forward) for validation.
# ----------------------------------------------------------------------------
def center_prior_reference(anchor_points_list, gt_bboxes, labels,
                           inside_gt_bbox_mask, mean, sigma,
                           strides=(8, 16, 32, 64, 128), soft_prior=True):
    num_gts = labels.shape[0]
    out_list = []
    gt_center = jnp.stack((gt_bboxes[:, 0], gt_bboxes[:, 1]), axis=1)[None]   # [1, G, 2]
    inst_center = mean[labels][None]
    inst_sigma = sigma[labels][None]
    for slvl_points, stride in zip(anchor_points_list, strides):
        pts = jnp.broadcast_to(slvl_points[:, None, :],
                               (slvl_points.shape[0], num_gts, 2))
        distance = ((pts - gt_center) / float(stride) - inst_center) ** 2
        prior = jnp.prod(jnp.exp(-distance / (2 * inst_sigma ** 2)), axis=-1)
        out_list.append(prior)
    w = jnp.concatenate(out_list, axis=0)
    if not soft_prior:
        w = jnp.where(w > 0.3, 1.0, 0.0)
    w = jnp.where(inside_gt_bbox_mask, w, 0.0)
    return w, inside_gt_bbox_mask


if __name__ == "__main__":
    key = jax.random.PRNGKey(0)
    num_classes = 16
    strides = (8, 16, 32, 64, 128)
    level_sizes = (16, 16, 8, 8, 8)           # small per-level point counts
    num_points = sum(level_sizes)
    num_gts = 6

    # Frozen module parameters (deterministic, per __init__).
    mean = jnp.zeros((num_classes, 2), jnp.float32)
    sigma = jnp.ones((num_classes, 2), jnp.float32) + 0.11

    keys = jax.random.split(key, 4)
    anchor_points_list = []
    pk = jax.random.split(keys[0], len(level_sizes))
    for n, k in zip(level_sizes, pk):
        anchor_points_list.append(
            jax.random.uniform(k, (n, 2), jnp.float32, 0.0, 256.0))
    gt_bboxes = jax.random.uniform(keys[1], (num_gts, 5), jnp.float32, 0.0, 256.0)
    labels = jax.random.randint(keys[2], (num_gts,), 0, num_classes, jnp.int32)
    inside_gt_bbox_mask = jax.random.bernoulli(
        keys[3], 0.6, (num_points, num_gts))

    # --- soft prior (default module config) ---
    weights, mask_out = center_prior_forward(
        anchor_points_list, gt_bboxes, labels, inside_gt_bbox_mask,
        mean, sigma, strides=strides, soft_prior=True)
    weights = jax.block_until_ready(weights)

    ref_w, _ = center_prior_reference(
        anchor_points_list, gt_bboxes, labels, inside_gt_bbox_mask,
        mean, sigma, strides=strides, soft_prior=True)

    np.testing.assert_allclose(np.asarray(weights), np.asarray(ref_w),
                               rtol=2e-3, atol=1e-5)
    np.testing.assert_array_equal(np.asarray(mask_out),
                                  np.asarray(inside_gt_bbox_mask))
    assert weights.shape == (num_points, num_gts)

    # --- hard prior path (thresholded) ---
    weights_h, _ = center_prior_forward(
        anchor_points_list, gt_bboxes, labels, inside_gt_bbox_mask,
        mean, sigma, strides=strides, soft_prior=False)
    weights_h = jax.block_until_ready(weights_h)
    ref_h, _ = center_prior_reference(
        anchor_points_list, gt_bboxes, labels, inside_gt_bbox_mask,
        mean, sigma, strides=strides, soft_prior=False)
    np.testing.assert_allclose(np.asarray(weights_h), np.asarray(ref_h),
                               rtol=0.0, atol=1e-6)

    print("KERNEL_OK")
</pallas_src>

<mosaic_0001>
module attributes {stable_mosaic.version = 11 : i64} {
  func.func @kernel(%arg0: i32, %arg1: memref<3x128xf32, #tpu.memory_space<vmem>>, %arg2: memref<8x8xf32, #tpu.memory_space<vmem>>, %arg3: memref<8x128xi8, #tpu.memory_space<vmem>>, %arg4: memref<8x128xf32, #tpu.memory_space<vmem>>) attributes {dimension_semantics = [#tpu.dimension_semantics<parallel>], iteration_bounds = array<i64: 1>, scalar_prefetch = 0 : i64, scratch_operands = 0 : i64, tpu.core_type = #tpu.core_type<tc>, window_params = [{transform_indices = @transform_0, window_bounds = array<i64: 3, 128>}, {pipeline_mode = #tpu.pipeline_mode<synchronous>, transform_indices = @transform_1, window_bounds = array<i64: 8, 8>}, {transform_indices = @transform_2, window_bounds = array<i64: 8, 128>}, {transform_indices = @transform_3, window_bounds = array<i64: 8, 128>}]} {
    %c0 = arith.constant 0 : index
    %c0_0 = arith.constant 0 : index
    %0 = vector.load %arg1[%c0, %c0_0] : memref<3x128xf32, #tpu.memory_space<vmem>>, vector<1x128xf32>
    %c1 = arith.constant 1 : index
    %c0_1 = arith.constant 0 : index
    %1 = vector.load %arg1[%c1, %c0_1] : memref<3x128xf32, #tpu.memory_space<vmem>>, vector<1x128xf32>
    %c2 = arith.constant 2 : index
    %c0_2 = arith.constant 0 : index
    %2 = vector.load %arg1[%c2, %c0_2] : memref<3x128xf32, #tpu.memory_space<vmem>>, vector<1x128xf32>
    %c0_3 = arith.constant 0 : index
    %c0_4 = arith.constant 0 : index
    %3 = vector.load %arg2[%c0_3, %c0_4] : memref<8x8xf32, #tpu.memory_space<vmem>>, vector<8x1xf32>
    %c0_5 = arith.constant 0 : index
    %c1_6 = arith.constant 1 : index
    %4 = vector.load %arg2[%c0_5, %c1_6] : memref<8x8xf32, #tpu.memory_space<vmem>>, vector<8x1xf32>
    %c0_7 = arith.constant 0 : index
    %c2_8 = arith.constant 2 : index
    %5 = vector.load %arg2[%c0_7, %c2_8] : memref<8x8xf32, #tpu.memory_space<vmem>>, vector<8x1xf32>
    %c0_9 = arith.constant 0 : index
    %c3 = arith.constant 3 : index
    %6 = vector.load %arg2[%c0_9, %c3] : memref<8x8xf32, #tpu.memory_space<vmem>>, vector<8x1xf32>
    %c0_10 = arith.constant 0 : index
    %c4 = arith.constant 4 : index
    %7 = vector.load %arg2[%c0_10, %c4] : memref<8x8xf32, #tpu.memory_space<vmem>>, vector<8x1xf32>
    %c0_11 = arith.constant 0 : index
    %c5 = arith.constant 5 : index
    %8 = vector.load %arg2[%c0_11, %c5] : memref<8x8xf32, #tpu.memory_space<vmem>>, vector<8x1xf32>
    %9 = vector.broadcast %0 : vector<1x128xf32> to vector<8x128xf32>
    %10 = vector.broadcast %3 : vector<8x1xf32> to vector<8x128xf32>
    %11 = arith.subf %9, %10 : vector<8x128xf32>
    %12 = vector.broadcast %2 : vector<1x128xf32> to vector<8x128xf32>
    %13 = arith.mulf %11, %12 : vector<8x128xf32>
    %14 = vector.broadcast %5 : vector<8x1xf32> to vector<8x128xf32>
    %15 = arith.subf %13, %14 : vector<8x128xf32>
    %16 = vector.broadcast %1 : vector<1x128xf32> to vector<8x128xf32>
    %17 = vector.broadcast %4 : vector<8x1xf32> to vector<8x128xf32>
    %18 = arith.subf %16, %17 : vector<8x128xf32>
    %19 = vector.broadcast %2 : vector<1x128xf32> to vector<8x128xf32>
    %20 = arith.mulf %18, %19 : vector<8x128xf32>
    %21 = vector.broadcast %6 : vector<8x1xf32> to vector<8x128xf32>
    %22 = arith.subf %20, %21 : vector<8x128xf32>
    %23 = arith.mulf %15, %15 : vector<8x128xf32>
    %cst = arith.constant 0.000000e+00 : f32
    %24 = vector.broadcast %cst : f32 to vector<8x128xf32>
    %25 = arith.subf %24, %23 : vector<8x128xf32>
    %26 = vector.broadcast %7 : vector<8x1xf32> to vector<8x128xf32>
    %27 = arith.mulf %25, %26 : vector<8x128xf32>
    %28 = arith.mulf %22, %22 : vector<8x128xf32>
    %29 = vector.broadcast %8 : vector<8x1xf32> to vector<8x128xf32>
    %30 = arith.mulf %28, %29 : vector<8x128xf32>
    %31 = arith.subf %27, %30 : vector<8x128xf32>
    %32 = math.exp %31 : vector<8x128xf32>
    %c0_12 = arith.constant 0 : index
    %c0_13 = arith.constant 0 : index
    %33 = vector.load %arg3[%c0_12, %c0_13] : memref<8x128xi8, #tpu.memory_space<vmem>>, vector<8x128xi8>
    %c0_i8 = arith.constant 0 : i8
    %34 = vector.broadcast %c0_i8 : i8 to vector<8x128xi8>
    %35 = arith.cmpi ne, %33, %34 : vector<8x128xi8>
    %cst_14 = arith.constant 0.000000e+00 : f32
    %36 = vector.broadcast %cst_14 : f32 to vector<8x128xf32>
    %37 = arith.select %35, %32, %36 : vector<8x128xi1>, vector<8x128xf32>
    %c0_15 = arith.constant 0 : index
    %c0_16 = arith.constant 0 : index
    %38 = vector.load %arg4[%c0_15, %c0_16] : memref<8x128xf32, #tpu.memory_space<vmem>>, vector<8x128xf32>
    tpu.vector_store %arg4[%c0_15, %c0_16], %37 {strides = array<i32>} : memref<8x128xf32, #tpu.memory_space<vmem>>, vector<8x128xf32>,
    return
  }
  func.func @transform_0(%arg0: i32) -> (i32, i32) {
    %c0_i32 = arith.constant 0 : i32
    %c0_i32_0 = arith.constant 0 : i32
    return %c0_i32, %arg0 : i32, i32
  }
  func.func @transform_1(%arg0: i32) -> (i32, i32) {
    %c0_i32 = arith.constant 0 : i32
    %c0_i32_0 = arith.constant 0 : i32
    %c0_i32_1 = arith.constant 0 : i32
    return %c0_i32, %c0_i32_0 : i32, i32
  }
  func.func @transform_2(%arg0: i32) -> (i32, i32) {
    %c0_i32 = arith.constant 0 : i32
    %c0_i32_0 = arith.constant 0 : i32
    return %c0_i32, %arg0 : i32, i32
  }
  func.func @transform_3(%arg0: i32) -> (i32, i32) {
    %c0_i32 = arith.constant 0 : i32
    %c0_i32_0 = arith.constant 0 : i32
    return %c0_i32, %arg0 : i32, i32
  }
}

</mosaic_0001>

<llo_original>
// kernel: tpu_custom_call.1
$region0: #{tpu_custom_call.1}
  #allocation0 [shape = 'u32[]', space=smem, size = 0x4, offset = 0x4, fixed_abs, tag = 'smem constant byte address 0x4 - core index']
  #allocation1 [shape = 'u32[72,128]{1,0:T(1,128)}', space=vmem, size = 0x9000, scoped, tag = 'internal scratch']
  %s0 = inlined_call_operand.hbm [shape: f32[3,128], index: 0, kind: input, shape index: {}]
  %s1 = inlined_call_operand.hbm [shape: f32[8,8], index: 1, kind: input, shape index: {}]
  %s2 = inlined_call_operand.hbm [shape: s8[8,128], index: 2, kind: input, shape index: {}]
  %s3 = inlined_call_operand.hbm [shape: f32[8,128], index: 3, kind: output, shape index: {}]
  %s4 = sld [smem:[#allocation0]]
  $region34: #{tpu_custom_call.1} parent=0
    _
  %s6 = ssub.s32 1, %s4
  %s7 = scalar_select 0, %s6, %s4
  $region1: #{tpu_custom_call.1} parent=0
    #allocation2 [shape = 'u8[2048]{0}', space=vmem, size = 0x800, scoped, tag = 'input window, operand 0, single buffered']
    #allocation3 [shape = 's32[1]{0}', space=sflag, size = 0x4, scoped, tag = 'scoped memory for tpu_custom_call.1']
    #allocation4 [shape = 's32[1]{0}', space=sflag, size = 0x4, scoped, tag = 'scoped memory for tpu_custom_call.1']
    #allocation5 [shape = 'u8[4096]{0}', space=vmem, size = 0x1000, scoped, tag = 'input window, operand 1, single buffered']
    #allocation6 [shape = 's32[1]{0}', space=sflag, size = 0x4, scoped, tag = 'scoped memory for tpu_custom_call.1']
    #allocation7 [shape = 'u8[1024]{0}', space=vmem, size = 0x400, scoped, tag = 'input window, operand 2, single buffered']
    #allocation8 [shape = 'u8[4096]{0}', space=vmem, size = 0x1000, scoped, tag = 'output window, operand 0, single buffered']
    %8 = vsyncpa [#allocation3], 0
    %9 = vsyncpa [#allocation6], 0
    %10 = vsyncpa [#allocation4], 0
    // Predicated region
    $region2: #{tpu_custom_call.1} parent=1 // pred_check
      _
    $region3: #{tpu_custom_call.1} parent=1 // pred_check_branch
      %12 = sbr.rel (0) target = $region5
    $region4: #{tpu_custom_call.1} parent=1 // pred_region
      %14 = vsyncadd [#allocation3], 0
      %s16 = sshll.u32 %s0, 4
      %s17 = int_to_ptr.hbm [resolvable:$true] %s16
      %s18 = sshll.u32 [#allocation2], 4
      %s19 = int_to_ptr.vmem [resolvable:$true] %s18
      %21 = dma.hbm_to_vmem [thread:$0]  %s17, 64, %s19, [#allocation3]
    $region5: #{tpu_custom_call.1} parent=1 // pred_fallthru
      _
    // Predicated region
    $region6: #{tpu_custom_call.1} parent=1 // pred_check
      _
    $region7: #{tpu_custom_call.1} parent=1 // pred_check_branch
      %23 = sbr.rel (0) target = $region9
    $region8: #{tpu_custom_call.1} parent=1 // pred_region
      %25 = vsyncadd [#allocation6], 0
      %s27 = sshll.u32 %s1, 4
      %s28 = int_to_ptr.hbm [resolvable:$true] %s27
      %s29 = sshll.u32 [#allocation5], 4
      %s30 = int_to_ptr.vmem [resolvable:$true] %s29
      %32 = dma.hbm_to_vmem [thread:$0]  %s28, 128, %s30, [#allocation6]
    $region9: #{tpu_custom_call.1} parent=1 // pred_fallthru
      _
    // Predicated region
    $region10: #{tpu_custom_call.1} parent=1 // pred_check
      _
    $region11: #{tpu_custom_call.1} parent=1 // pred_check_branch
      %34 = sbr.rel (0) target = $region13
    $region12: #{tpu_custom_call.1} parent=1 // pred_region
      %36 = vsyncadd [#allocation6], 0
      %s38 = sshll.u32 %s2, 4
      %s39 = int_to_ptr.hbm [resolvable:$true] %s38
      %s40 = sshll.u32 [#allocation7], 4
      %s41 = int_to_ptr.vmem [resolvable:$true] %s40
      %43 = dma.hbm_to_vmem [thread:$0]  %s39, 32, %s41, [#allocation6]
    $region13: #{tpu_custom_call.1} parent=1 // pred_fallthru
      _
    // Predicated region
    $region14: #{tpu_custom_call.1} parent=1 // pred_check
      _
    $region15: #{tpu_custom_call.1} parent=1 // pred_check_branch
      %45 = sbr.rel (0) target = $region17
    $region16: #{tpu_custom_call.1} parent=1 // pred_region
      %47 = dma.done [#allocation3], 64
    $region17: #{tpu_custom_call.1} parent=1 // pred_fallthru
      _
    // Predicated region
    $region18: #{tpu_custom_call.1} parent=1 // pred_check
      _
    $region19: #{tpu_custom_call.1} parent=1 // pred_check_branch
      %49 = sbr.rel (0) target = $region21
    $region20: #{tpu_custom_call.1} parent=1 // pred_region
      %51 = dma.done [#allocation6], 128
    $region21: #{tpu_custom_call.1} parent=1 // pred_fallthru
      _
    // Predicated region
    $region22: #{tpu_custom_call.1} parent=1 // pred_check
      _
    $region23: #{tpu_custom_call.1} parent=1 // pred_check_branch
      %53 = sbr.rel (0) target = $region25
    $region24: #{tpu_custom_call.1} parent=1 // pred_region
      %55 = dma.done [#allocation6], 32
    $region25: #{tpu_custom_call.1} parent=1 // pred_fallthru
      _
    %v58 = vld [vmem:[#allocation2] sm:$0x1]
    %v59 = vld [vmem:[#allocation2 + $0x1] sm:$0x1]
    %v60 = vld [vmem:[#allocation2 + $0x2] sm:$0x1]
    %v61 = vld [vmem:[#allocation5] sm:$0xff]
    %v62 = vperm.slane %v58, 0
    %64 = vset.pattern.permute.xlu0 0
    %65 = vperm.xlu0 %64, %v61
    %v66 = vpop.permute.xlu0 %65
    %v68 = vsub.f32 %v62, %v66
    %v69 = vperm.slane %v60, 0
    %v70 = vmul.f32 %v68, %v69
    %71 = vset.pattern.permute.xlu0 2
    %72 = vperm.xlu0 %71, %v61
    %v73 = vpop.permute.xlu0 %72
    %v75 = vsub.f32 %v70, %v73
    %v76 = vperm.slane %v59, 0
    %77 = vset.pattern.permute.xlu0 1
    %78 = vperm.xlu0 %77, %v61
    %v79 = vpop.permute.xlu0 %78
    %v81 = vsub.f32 %v76, %v79
    %v82 = vmul.f32 %v81, %v69
    %83 = vset.pattern.permute.xlu0 3
    %84 = vperm.xlu0 %83, %v61
    %v85 = vpop.permute.xlu0 %84
    %v87 = vsub.f32 %v82, %v85
    %v88 = vmul.f32 %v75, %v75
    %v89 = vsub.f32 0.0, %v88
    %90 = vset.pattern.permute.xlu0 4
    %91 = vperm.xlu0 %90, %v61
    %v92 = vpop.permute.xlu0 %91
    %v94 = vmul.f32 %v89, %v92
    %v95 = vmul.f32 %v87, %v87
    %96 = vset.pattern.permute.xlu0 5
    %97 = vperm.xlu0 %96, %v61
    %v98 = vpop.permute.xlu0 %97
    %v100 = vmul.f32 %v95, %v98
    %v101 = vsub.f32 %v94, %v100
    %v102 = vmul.f32 %v101, 1.442695
    %v103 = vpow.pop %v102
    %v104 = vld [vmem:[#allocation7] sm:$0x3]
    %vm105 = vnez %v104
    %v106 = vsel %vm105, 16843009, 0
    %v107 = vunpack.c.0.s8 %v106
    %vm108 = vcmp.ne.s32.totalorder %v107, 0
    %v109 = vsel %vm108, %v103, 0.0
    %110 = vst [vmem:[#allocation8] sm:$0xff] %v109
    // Predicated region
    $region26: #{tpu_custom_call.1} parent=1 // pred_check
      _
    $region27: #{tpu_custom_call.1} parent=1 // pred_check_branch
      %112 = sbr.rel (0) target = $region29
    $region28: #{tpu_custom_call.1} parent=1 // pred_region
      %114 = vsyncadd [#allocation4], 0
      %s116 = sshll.u32 [#allocation8], 4
      %s117 = int_to_ptr.vmem [resolvable:$true] %s116
      %s118 = sshll.u32 %s3, 4
      %s119 = int_to_ptr.hbm [resolvable:$true] %s118
      %121 = dma.vmem_to_hbm [thread:$0]  %s117, 128, %s119, [#allocation4]
    $region29: #{tpu_custom_call.1} parent=1 // pred_fallthru
      _
    // Predicated region
    $region30: #{tpu_custom_call.1} parent=1 // pred_check
      _
    $region31: #{tpu_custom_call.1} parent=1 // pred_check_branch
      %123 = sbr.rel (0) target = $region33
    $region32: #{tpu_custom_call.1} parent=1 // pred_region
      %125 = dma.done [#allocation4], 128
    $region33: #{tpu_custom_call.1} parent=1 // pred_fallthru
      _
    %126 = vsyncpa [#allocation3], 1
    %127 = vsyncpa [#allocation6], 1
    %128 = vsyncpa [#allocation4], 1

</llo_original>
